<compile_context>
chip_gen: v5e
topology: v5e:2x2
jax: 0.10.0
libtpu: 0.0.40
codegen_flags: <defaults>
</compile_context>

<pallas_src>
import functools

import jax
import jax.numpy as jnp
import numpy as np
from jax.experimental import pallas as pl
from jax.experimental.pallas import tpu as pltpu

SIGMA = 9.0
LANE = 128
ROW_ALIGN = 32          # lcm of f32 (8) and int8 (32) sublane tiling
MAX_TILE_ROWS = 1024    # (1024, 128) f32 tile = 512 KiB per input
NUM_CORE_SPLITS = 2     # leading "parallel" grid axis (uses both TCs on v7x)


def _round_up(x, m):
    return ((x + m - 1) // m) * m


def _choose_tiling(two_n):
    """Return (rows, tile_rows, num_splits, tiles_per_split) for the (rows, 128) slabs."""
    rows = _round_up(max(ROW_ALIGN, pl.cdiv(two_n, LANE)), ROW_ALIGN)
    if rows <= MAX_TILE_ROWS:
        return rows, rows, 1, 1                     # single block, no grid overhead
    num_tiles = _round_up(pl.cdiv(rows, MAX_TILE_ROWS), NUM_CORE_SPLITS)
    tile_rows = _round_up(pl.cdiv(rows, num_tiles), ROW_ALIGN)
    rows = tile_rows * num_tiles
    return rows, tile_rows, NUM_CORE_SPLITS, num_tiles // NUM_CORE_SPLITS


def _rpn_regr_loss_kernel(pred_ref, regr_ref, mask_ref, out_ref, loss_acc, *, sigma):
    i = pl.program_id(1)  # reduction ("arbitrary") axis; axis 0 is the core split

    @pl.when(i == 0)
    def _():
        loss_acc[...] = jnp.zeros_like(loss_acc)

    pred = pred_ref[...].astype(jnp.float32)   # (T, 128)
    regr = regr_ref[...].astype(jnp.float32)   # (T, 128)
    mask = mask_ref[...].astype(jnp.float32)   # (T, 128) int8 -> f32, 1.0 where positive

    diff = jnp.abs(regr - pred)
    loss = jnp.where(diff < (1.0 / sigma),
                     0.5 * sigma * diff * diff,
                     diff - 0.5 / sigma)
    loss = loss * mask                         # padded lanes / negative anchors -> 0

    # Fold (T, 128) -> (8, 128) partial sums with pure VPU adds (no per-tile XLU reduce).
    t = loss.shape[0]
    loss_acc[...] += jnp.sum(loss.reshape(t // 8, 8, LANE), axis=0)

    @pl.when(i == pl.num_programs(1) - 1)
    def _():
        out_ref[0, 0] = jnp.sum(loss_acc[...])  # per-split partial sum


@functools.partial(jax.jit, static_argnums=(2,))
def _rpn_regr_loss_impl(input_arr, target, sigma):
    n = input_arr.shape[1]
    two_n = 2 * n
    rows, tile_rows, num_splits, tiles_per_split = _choose_tiling(two_n)
    padded = rows * LANE

    # Row-major flatten: [dy0, dh0, dy1, dh1, ...]; mask repeated per channel as int8.
    pred = input_arr[0].reshape(-1)                      # (2N,)
    regr = target[0, :, 1:3].reshape(-1)                 # (2N,)
    cls = target[0, :, 0]
    pos = (cls == 1)
    count = jnp.sum(pos, dtype=jnp.float32)              # positive anchors (wrapper-side)
    mask = jnp.repeat(pos.astype(jnp.int8), 2)           # (2N,) int8

    pad = padded - two_n
    pred = jnp.pad(pred, (0, pad)).reshape(rows, LANE)
    regr = jnp.pad(regr, (0, pad)).reshape(rows, LANE)
    mask = jnp.pad(mask, (0, pad)).reshape(rows, LANE)   # padded lanes: mask = 0

    slab_spec = pl.BlockSpec((tile_rows, LANE),
                             lambda c, i: (c * tiles_per_split + i, 0))

    kernel = functools.partial(_rpn_regr_loss_kernel, sigma=float(sigma))
    partials = pl.pallas_call(
        kernel,
        out_shape=jax.ShapeDtypeStruct((num_splits, 1), jnp.float32),
        grid_spec=pltpu.PrefetchScalarGridSpec(
            num_scalar_prefetch=0,
            grid=(num_splits, tiles_per_split),
            in_specs=[slab_spec, slab_spec, slab_spec],
            out_specs=pl.BlockSpec((1, 1), lambda c, i: (c, 0),
                                   memory_space=pltpu.MemorySpace.SMEM),
            scratch_shapes=[
                pltpu.VMEM((8, LANE), jnp.float32),  # loss partial sums (per core)
            ],
        ),
        compiler_params=pltpu.CompilerParams(
            dimension_semantics=("parallel", "arbitrary"),
        ),
    )(pred, regr, mask)

    total = jnp.sum(partials)
    return jnp.where(count > 0.0, total / jnp.maximum(count, 1.0), 0.0)


def rpn_regr_loss(input_arr, target, sigma=SIGMA):
    """input_arr: (1, N, 2) predictions; target: (1, N, 3) = [cls, dy, dh]."""
    assert input_arr.shape[0] == 1 and target.shape[0] == 1
    return _rpn_regr_loss_impl(input_arr, target, float(sigma))


def _reference(input_arr, target, sigma=SIGMA):
    """NumPy replica of the PyTorch forward (with the real gather), in float64."""
    cls = np.asarray(target[0, :, 0], dtype=np.float64)
    regression = np.asarray(target[0, :, 1:3], dtype=np.float64)
    keep = np.nonzero(cls == 1)[0]
    regr_true = regression[keep]
    regr_pred = np.asarray(input_arr[0], dtype=np.float64)[keep]
    diff = np.abs(regr_true - regr_pred)
    loss = np.where(diff < 1.0 / sigma, 0.5 * sigma * diff * diff, diff - 0.5 / sigma)
    loss = loss.sum(axis=1)
    return float(loss.mean()) if loss.size > 0 else 0.0


def _make_inputs(key, n, positive_frac=0.5):
    k1, k2, k3 = jax.random.split(key, 3)
    inp = jax.random.normal(k1, (1, n, 2), dtype=jnp.float32)
    cls = (jax.random.uniform(k2, (n,)) < positive_frac).astype(jnp.float32)
    regr = jax.random.normal(k3, (n, 2), dtype=jnp.float32)
    target = jnp.concatenate([cls[:, None], regr], axis=1)[None, :, :]  # (1, N, 3)
    return inp, target


def _check(inp, tgt):
    loss = jax.block_until_ready(rpn_regr_loss(inp, tgt))
    ref = _reference(np.asarray(inp), np.asarray(tgt))
    assert abs(float(loss) - ref) <= 1e-5 + 1e-4 * abs(ref), (float(loss), ref)


if __name__ == "__main__":
    key = jax.random.PRNGKey(0)
    k_small, k_mid, k_big = jax.random.split(key, 3)

    # Small case (single 32-row block, no grid overhead).
    _check(*_make_inputs(k_small, 16))

    # Edge case: no positive anchors -> 0.0 (matches the PyTorch fallback).
    inp_z, tgt_z = _make_inputs(k_small, 16, positive_frac=0.0)
    _check(inp_z, tgt_z)

    # Moderate case (single 640-row block).
    _check(*_make_inputs(k_mid, 40000))

    # Large case exercising the multi-tile grid + dual core-split + accumulator path.
    _check(*_make_inputs(k_big, 150000))

    print("KERNEL_OK")
</pallas_src>

<mosaic_0001>
module attributes {stable_mosaic.version = 11 : i64} {
  func.func @_rpn_regr_loss_kernel(%arg0: i32, %arg1: i32, %arg2: memref<32x128xf32, #tpu.memory_space<vmem>>, %arg3: memref<32x128xf32, #tpu.memory_space<vmem>>, %arg4: memref<32x128xi8, #tpu.memory_space<vmem>>, %arg5: memref<1x1xf32, #tpu.memory_space<smem>>, %arg6: memref<8x128xf32, #tpu.memory_space<vmem>>) attributes {dimension_semantics = [#tpu.dimension_semantics<parallel>, #tpu.dimension_semantics<arbitrary>], iteration_bounds = array<i64: 1, 1>, scalar_prefetch = 0 : i64, scratch_operands = 1 : i64, tpu.core_type = #tpu.core_type<tc>, window_params = [{transform_indices = @transform_0, window_bounds = array<i64: 32, 128>}, {transform_indices = @transform_1, window_bounds = array<i64: 32, 128>}, {transform_indices = @transform_2, window_bounds = array<i64: 32, 128>}, {transform_indices = @transform_3, window_bounds = array<i64: 1, 1>}]} {
    %c0_i32 = arith.constant 0 : i32
    %0 = arith.cmpi eq, %arg1, %c0_i32 : i32
    %1 = arith.extui %0 : i1 to i32
    %c0_i32_0 = arith.constant 0 : i32
    %2 = arith.cmpi ne, %1, %c0_i32_0 : i32
    scf.if %2 {
      %cst_15 = arith.constant 0.000000e+00 : f32
      %26 = vector.broadcast %cst_15 : f32 to vector<8x128xf32>
      %c0_16 = arith.constant 0 : index
      %c0_17 = arith.constant 0 : index
      %27 = vector.load %arg6[%c0_16, %c0_17] : memref<8x128xf32, #tpu.memory_space<vmem>>, vector<8x128xf32>
      tpu.vector_store %arg6[%c0_16, %c0_17], %26 {strides = array<i32>} : memref<8x128xf32, #tpu.memory_space<vmem>>, vector<8x128xf32>,
    } else {
    }
    %c0 = arith.constant 0 : index
    %c0_1 = arith.constant 0 : index
    %3 = vector.load %arg2[%c0, %c0_1] : memref<32x128xf32, #tpu.memory_space<vmem>>, vector<32x128xf32>
    %c0_2 = arith.constant 0 : index
    %c0_3 = arith.constant 0 : index
    %4 = vector.load %arg3[%c0_2, %c0_3] : memref<32x128xf32, #tpu.memory_space<vmem>>, vector<32x128xf32>
    %c0_4 = arith.constant 0 : index
    %c0_5 = arith.constant 0 : index
    %5 = vector.load %arg4[%c0_4, %c0_5] : memref<32x128xi8, #tpu.memory_space<vmem>>, vector<32x128xi8>
    %6 = arith.sitofp %5 : vector<32x128xi8> to vector<32x128xf32>
    %7 = arith.subf %4, %3 : vector<32x128xf32>
    %8 = math.absf %7 : vector<32x128xf32>
    %cst = arith.constant 0.111111112 : f32
    %9 = vector.broadcast %cst : f32 to vector<32x128xf32>
    %10 = arith.cmpf olt, %8, %9 : vector<32x128xf32>
    %cst_6 = arith.constant 4.500000e+00 : f32
    %11 = vector.broadcast %cst_6 : f32 to vector<32x128xf32>
    %12 = arith.mulf %11, %8 : vector<32x128xf32>
    %13 = arith.mulf %12, %8 : vector<32x128xf32>
    %cst_7 = arith.constant 0.055555556 : f32
    %14 = vector.broadcast %cst_7 : f32 to vector<32x128xf32>
    %15 = arith.subf %8, %14 : vector<32x128xf32>
    %16 = arith.select %10, %13, %15 : vector<32x128xi1>, vector<32x128xf32>
    %17 = arith.mulf %16, %6 : vector<32x128xf32>
    %c0_8 = arith.constant 0 : index
    %c0_9 = arith.constant 0 : index
    %18 = vector.load %arg6[%c0_8, %c0_9] : memref<8x128xf32, #tpu.memory_space<vmem>>, vector<8x128xf32>
    %19 = vector.shape_cast %17 : vector<32x128xf32> to vector<4x8x128xf32>
    %cst_10 = arith.constant dense<0.000000e+00> : vector<8x128xf32>
    %20 = vector.multi_reduction <add>, %19, %cst_10 [0] : vector<4x8x128xf32> to vector<8x128xf32>
    %21 = arith.addf %18, %20 : vector<8x128xf32>
    %c0_11 = arith.constant 0 : index
    %c0_12 = arith.constant 0 : index
    %22 = vector.load %arg6[%c0_11, %c0_12] : memref<8x128xf32, #tpu.memory_space<vmem>>, vector<8x128xf32>
    tpu.vector_store %arg6[%c0_11, %c0_12], %21 {strides = array<i32>} : memref<8x128xf32, #tpu.memory_space<vmem>>, vector<8x128xf32>,
    %c0_i32_13 = arith.constant 0 : i32
    %23 = arith.cmpi eq, %arg1, %c0_i32_13 : i32
    %24 = arith.extui %23 : i1 to i32
    %c0_i32_14 = arith.constant 0 : i32
    %25 = arith.cmpi ne, %24, %c0_i32_14 : i32
    scf.if %25 {
      %c0_15 = arith.constant 0 : index
      %c0_16 = arith.constant 0 : index
      %26 = vector.load %arg6[%c0_15, %c0_16] : memref<8x128xf32, #tpu.memory_space<vmem>>, vector<8x128xf32>
      %27 = vector.shape_cast %26 : vector<8x128xf32> to vector<1x8x128xf32>
      %cst_17 = arith.constant dense<0.000000e+00> : vector<1xf32>
      %28 = vector.multi_reduction <add>, %27, %cst_17 [1, 2] : vector<1x8x128xf32> to vector<1xf32>
      %29 = vector.shape_cast %28 : vector<1xf32> to vector<1x1x1xf32>
      %30 = vector.extract %29[0, 0, 0] : f32 from vector<1x1x1xf32>
      %c0_18 = arith.constant 0 : index
      %c0_19 = arith.constant 0 : index
      %31 = memref.load %arg5[%c0_18, %c0_19] : memref<1x1xf32, #tpu.memory_space<smem>>
      memref.store %30, %arg5[%c0_18, %c0_19] : memref<1x1xf32, #tpu.memory_space<smem>>
    } else {
    }
    return
  }
  func.func @transform_0(%arg0: i32, %arg1: i32) -> (i32, i32) {
    %c1_i32 = arith.constant 1 : i32
    %0 = arith.muli %arg0, %c1_i32 : i32
    %1 = arith.addi %0, %arg1 : i32
    %c0_i32 = arith.constant 0 : i32
    %c0_i32_0 = arith.constant 0 : i32
    return %1, %c0_i32 : i32, i32
  }
  func.func @transform_1(%arg0: i32, %arg1: i32) -> (i32, i32) {
    %c1_i32 = arith.constant 1 : i32
    %0 = arith.muli %arg0, %c1_i32 : i32
    %1 = arith.addi %0, %arg1 : i32
    %c0_i32 = arith.constant 0 : i32
    %c0_i32_0 = arith.constant 0 : i32
    return %1, %c0_i32 : i32, i32
  }
  func.func @transform_2(%arg0: i32, %arg1: i32) -> (i32, i32) {
    %c1_i32 = arith.constant 1 : i32
    %0 = arith.muli %arg0, %c1_i32 : i32
    %1 = arith.addi %0, %arg1 : i32
    %c0_i32 = arith.constant 0 : i32
    %c0_i32_0 = arith.constant 0 : i32
    return %1, %c0_i32 : i32, i32
  }
  func.func @transform_3(%arg0: i32, %arg1: i32) -> (i32, i32) {
    %c0_i32 = arith.constant 0 : i32
    %c0_i32_0 = arith.constant 0 : i32
    return %arg0, %c0_i32 : i32, i32
  }
}

</mosaic_0001>

<llo_original>
// kernel: squeeze.4
$region0: #{squeeze.4}
  %s0 = inlined_call_operand.vmem [shape: f32[1,16,2], index: 0, kind: input, shape index: {}]
  %s1 = inlined_call_operand.vmem [shape: f32[32], index: 1, kind: output, shape index: {}]
  $region1: #{squeeze.4} parent=0
    #allocation0 [shape = 'u8[4096]{0}', space=vmem, size = 0x1000, scoped, tag = 'scoped mem for output reshape']
    %v2 = vld [vmem:[%s0] sm:$0x1]
    %vm3 = vcmask 15360
    %4 = vst.msk [vmem:[#allocation0] sm:$0x1] %vm3, %v2
    %s5 = scalar_lea.vmem %s0, 15
    %v6 = vld [vmem:[%s5] sm:$0x1]
    %7 = vrot.lane.b32.xlu0 %v6, 30
    %v8 = vpop.permute.xlu0 %7
    %vm9 = vcmask 261360
    %10 = vst.msk [vmem:[#allocation0] sm:$0x1] %vm9, %v8
    %s11 = scalar_lea.vmem %s0, 14
    %v12 = vld [vmem:[%s11] sm:$0x1]
    %13 = vrot.lane.b32.xlu0 %v12, 28
    %v14 = vpop.permute.xlu0 %13
    %vm15 = vcmask 244960
    %16 = vst.msk [vmem:[#allocation0] sm:$0x1] %vm15, %v14
    %s17 = scalar_lea.vmem %s0, 13
    %v18 = vld [vmem:[%s17] sm:$0x1]
    %19 = vrot.lane.b32.xlu0 %v18, 26
    %v20 = vpop.permute.xlu0 %19
    %vm21 = vcmask 228560
    %22 = vst.msk [vmem:[#allocation0] sm:$0x1] %vm21, %v20
    %s23 = scalar_lea.vmem %s0, 12
    %v24 = vld [vmem:[%s23] sm:$0x1]
    %25 = vrot.lane.b32.xlu0 %v24, 24
    %v26 = vpop.permute.xlu0 %25
    %vm27 = vcmask 212160
    %28 = vst.msk [vmem:[#allocation0] sm:$0x1] %vm27, %v26
    %s29 = scalar_lea.vmem %s0, 11
    %v30 = vld [vmem:[%s29] sm:$0x1]
    %31 = vrot.lane.b32.xlu0 %v30, 22
    %v32 = vpop.permute.xlu0 %31
    %vm33 = vcmask 195760
    %34 = vst.msk [vmem:[#allocation0] sm:$0x1] %vm33, %v32
    %s35 = scalar_lea.vmem %s0, 10
    %v36 = vld [vmem:[%s35] sm:$0x1]
    %37 = vrot.lane.b32.xlu0 %v36, 20
    %v38 = vpop.permute.xlu0 %37
    %vm39 = vcmask 179360
    %40 = vst.msk [vmem:[#allocation0] sm:$0x1] %vm39, %v38
    %s41 = scalar_lea.vmem %s0, 9
    %v42 = vld [vmem:[%s41] sm:$0x1]
    %43 = vrot.lane.b32.xlu0 %v42, 18
    %v44 = vpop.permute.xlu0 %43
    %vm45 = vcmask 162960
    %46 = vst.msk [vmem:[#allocation0] sm:$0x1] %vm45, %v44
    %s47 = scalar_lea.vmem %s0, 8
    %v48 = vld [vmem:[%s47] sm:$0x1]
    %49 = vrot.lane.b32.xlu0 %v48, 16
    %v50 = vpop.permute.xlu0 %49
    %vm51 = vcmask 146560
    %52 = vst.msk [vmem:[#allocation0] sm:$0x1] %vm51, %v50
    %s53 = scalar_lea.vmem %s0, 7
    %v54 = vld [vmem:[%s53] sm:$0x1]
    %55 = vrot.lane.b32.xlu0 %v54, 14
    %v56 = vpop.permute.xlu0 %55
    %vm57 = vcmask 130160
    %58 = vst.msk [vmem:[#allocation0] sm:$0x1] %vm57, %v56
    %s59 = scalar_lea.vmem %s0, 6
    %v60 = vld [vmem:[%s59] sm:$0x1]
    %61 = vrot.lane.b32.xlu0 %v60, 12
    %v62 = vpop.permute.xlu0 %61
    %vm63 = vcmask 113760
    %64 = vst.msk [vmem:[#allocation0] sm:$0x1] %vm63, %v62
    %s65 = scalar_lea.vmem %s0, 5
    %v66 = vld [vmem:[%s65] sm:$0x1]
    %67 = vrot.lane.b32.xlu0 %v66, 10
    %v68 = vpop.permute.xlu0 %67
    %vm69 = vcmask 97360
    %70 = vst.msk [vmem:[#allocation0] sm:$0x1] %vm69, %v68
    %s71 = scalar_lea.vmem %s0, 4
    %v72 = vld [vmem:[%s71] sm:$0x1]
    %73 = vrot.lane.b32.xlu0 %v72, 8
    %v74 = vpop.permute.xlu0 %73
    %vm75 = vcmask 80960
    %76 = vst.msk [vmem:[#allocation0] sm:$0x1] %vm75, %v74
    %s77 = scalar_lea.vmem %s0, 3
    %v78 = vld [vmem:[%s77] sm:$0x1]
    %79 = vrot.lane.b32.xlu0 %v78, 6
    %v80 = vpop.permute.xlu0 %79
    %vm81 = vcmask 64560
    %82 = vst.msk [vmem:[#allocation0] sm:$0x1] %vm81, %v80
    %s83 = scalar_lea.vmem %s0, 2
    %v84 = vld [vmem:[%s83] sm:$0x1]
    %85 = vrot.lane.b32.xlu0 %v84, 4
    %v86 = vpop.permute.xlu0 %85
    %vm87 = vcmask 48160
    %88 = vst.msk [vmem:[#allocation0] sm:$0x1] %vm87, %v86
    %s89 = scalar_lea.vmem %s0, 1
    %v90 = vld [vmem:[%s89] sm:$0x1]
    %91 = vrot.lane.b32.xlu0 %v90, 2
    %v92 = vpop.permute.xlu0 %91
    %vm93 = vcmask 31760
    %94 = vst.msk [vmem:[#allocation0] sm:$0x1] %vm93, %v92
    %s96 = ssub.s32 2, 1
    %v97 = vld [vmem:[#allocation0] sm:%s96]
    %s99 = ssub.s32 2, 1
    %100 = vst [vmem:[%s1] sm:%s99] %v97

// kernel: _rpn_regr_loss_impl.1
$region0: #{_rpn_regr_loss_impl.1}
  #allocation0 [shape = 'u32[]', space=smem, size = 0x4, offset = 0x4, fixed_abs, tag = 'smem constant byte address 0x4 - core index']
  #allocation1 [shape = 'u32[72,128]{1,0:T(1,128)}', space=vmem, size = 0x9000, scoped, tag = 'internal scratch']
  #allocation2 [shape = 'f32[8,128]{1,0:T(8,128)}', space=vmem, size = 0x1000, scoped, tag = 'scratch operand']
  %s0 = inlined_call_operand.vmem [shape: f32[32,128], index: 0, kind: input, shape index: {}]
  %s1 = inlined_call_operand.vmem [shape: f32[32,128], index: 1, kind: input, shape index: {}]
  %s2 = inlined_call_operand.vmem [shape: s8[32,128], index: 2, kind: input, shape index: {}]
  %s3 = inlined_call_operand.hbm [shape: f32[1,1], index: 3, kind: output, shape index: {}]
  %s4 = sld [smem:[#allocation0]]
  $region30: #{_rpn_regr_loss_impl.1} parent=0
    _
  %s6 = ssub.s32 1, %s4
  %s7 = scalar_select 0, %s6, %s4
  $region1: #{_rpn_regr_loss_impl.1} parent=0
    #allocation3 [shape = 'u8[512]{0}', space=smem, size = 0x200, scoped, tag = 'output window, operand 0, single buffered']
    #allocation4 [shape = 's32[1]{0}', space=sflag, size = 0x4, scoped, tag = 'scoped memory for _rpn_regr_loss_impl.1']
    %8 = vsyncpa [#allocation4], 0
    // Predicated region
    $region2: #{_rpn_regr_loss_impl.1} parent=1 // pred_check
      _
    $region3: #{_rpn_regr_loss_impl.1} parent=1 // pred_check_branch
      %10 = sbr.rel (0) target = $region5
    $region4: #{_rpn_regr_loss_impl.1} parent=1 // pred_region
      %s11 = sadd.s32 0, 0
      %s12 = smul.u32 4, %s11
      %p13 = scmp.lt.s32.totalorder %s12, 3
      %s14 = scalar_select %p13, %s12, 3
      %s15 = smul.addr %s14, 8
      %s16 = scalar_lea.vmem %s0, %s15
      %s17 = sadd.s32 0, 0
      %s18 = smul.u32 4, %s17
    $region5: #{_rpn_regr_loss_impl.1} parent=1 // pred_fallthru
      _
    // Predicated region
    $region6: #{_rpn_regr_loss_impl.1} parent=1 // pred_check
      _
    $region7: #{_rpn_regr_loss_impl.1} parent=1 // pred_check_branch
      %20 = sbr.rel (0) target = $region9
    $region8: #{_rpn_regr_loss_impl.1} parent=1 // pred_region
      %s21 = sadd.s32 0, 0
      %s22 = smul.u32 4, %s21
      %p23 = scmp.lt.s32.totalorder %s22, 3
      %s24 = scalar_select %p23, %s22, 3
      %s25 = smul.addr %s24, 8
      %s26 = scalar_lea.vmem %s1, %s25
      %s27 = sadd.s32 0, 0
      %s28 = smul.u32 4, %s27
    $region9: #{_rpn_regr_loss_impl.1} parent=1 // pred_fallthru
      _
    // Predicated region
    $region10: #{_rpn_regr_loss_impl.1} parent=1 // pred_check
      _
    $region11: #{_rpn_regr_loss_impl.1} parent=1 // pred_check_branch
      %30 = sbr.rel (0) target = $region13
    $region12: #{_rpn_regr_loss_impl.1} parent=1 // pred_region
      %s31 = sadd.s32 0, 0
      %p32 = scmp.lt.s32.totalorder %s31, 0
      %s33 = scalar_select %p32, %s31, 0
      %s34 = smul.addr %s33, 8
      %s35 = scalar_lea.vmem %s2, %s34
      %s36 = sadd.s32 0, 0
    $region13: #{_rpn_regr_loss_impl.1} parent=1 // pred_fallthru
      _
    %s37 = sadd.s32 0, 0
    %s38 = smul.u32 4, %s37
    %p39 = scmp.lt.s32.totalorder %s38, 3
    %s40 = scalar_select %p39, %s38, 3
    %s41 = smul.addr %s40, 8
    %s42 = scalar_lea.vmem %s0, %s41
    %s43 = sadd.s32 0, 0
    %s44 = smul.u32 4, %s43
    %p45 = scmp.lt.s32.totalorder %s44, 3
    %s46 = scalar_select %p45, %s44, 3
    %s47 = smul.addr %s46, 8
    %s48 = scalar_lea.vmem %s1, %s47
    %s49 = sadd.s32 0, 0
    %p50 = scmp.lt.s32.totalorder %s49, 0
    %s51 = scalar_select %p50, %s49, 0
    %s52 = smul.addr %s51, 8
    %s53 = scalar_lea.vmem %s2, %s52
    %s54 = sadd.s32 0, 0
    %s55 = smul.u32 4, %s54
    %p56 = scmp.lt.s32.totalorder %s55, 3
    %s57 = scalar_select %p56, %s55, 3
    %s58 = smul.addr %s57, 8
    %s59 = scalar_lea.vmem %s0, %s58
    %s60 = sadd.s32 0, 0
    %s61 = smul.u32 4, %s60
    %s62 = sadd.s32 0, 0
    %s63 = smul.u32 4, %s62
    %p64 = scmp.lt.s32.totalorder %s63, 3
    %s65 = scalar_select %p64, %s63, 3
    %s66 = smul.addr %s65, 8
    %s67 = scalar_lea.vmem %s1, %s66
    %s68 = sadd.s32 0, 0
    %s69 = smul.u32 4, %s68
    %s70 = sadd.s32 0, 0
    %p71 = scmp.lt.s32.totalorder %s70, 0
    %s72 = scalar_select %p71, %s70, 0
    %s73 = smul.addr %s72, 8
    %s74 = scalar_lea.vmem %s2, %s73
    %s75 = sadd.s32 0, 0
    %p76 = scmp.eq.s32.totalorder 0, 0
    // Predicated region
    $region14: #{_rpn_regr_loss_impl.1} parent=1 // pred_check
      %p77 = pneg %p76
    $region15: #{_rpn_regr_loss_impl.1} parent=1 // pred_check_branch
      %79 = sbr.rel (%p77) target = $region17
    $region16: #{_rpn_regr_loss_impl.1} parent=1 // pred_region
      %80 = vst [vmem:[#allocation2] sm:$0xff] 0.0
    $region17: #{_rpn_regr_loss_impl.1} parent=1 // pred_fallthru
      _
    %v81 = vld [vmem:[%s59] sm:$0xff]
    %v82 = vld [vmem:[%s59 + $0x8] sm:$0xff]
    %v83 = vld [vmem:[%s59 + $0x10] sm:$0xff]
    %v84 = vld [vmem:[%s59 + $0x18] sm:$0xff]
    %v85 = vld [vmem:[%s67] sm:$0xff]
    %v86 = vld [vmem:[%s67 + $0x8] sm:$0xff]
    %v87 = vld [vmem:[%s67 + $0x10] sm:$0xff]
    %v88 = vld [vmem:[%s67 + $0x18] sm:$0xff]
    %v89 = vld [vmem:[%s74] sm:$0xff]
    %v90 = vunpack.c.0.s8 %v89
    %v91 = vunpack.c.1.s8 %v89
    %v92 = vunpack.c.2.s8 %v89
    %v93 = vunpack.c.3.s8 %v89
    %v94 = vcvt.s32.f32 %v90
    %v95 = vcvt.s32.f32 %v91
    %v96 = vcvt.s32.f32 %v92
    %v97 = vcvt.s32.f32 %v93
    %v98 = vsub.f32 %v85, %v81
    %v99 = vsub.f32 %v86, %v82
    %v100 = vsub.f32 %v87, %v83
    %v101 = vsub.f32 %v88, %v84
    %v102 = vand.u32 2147483647, %v98
    %v103 = vand.u32 2147483647, %v99
    %v104 = vand.u32 2147483647, %v100
    %v105 = vand.u32 2147483647, %v101
    %vm106 = vcmp.lt.f32.partialorder %v102, 0.11111111
    %vm107 = vcmp.lt.f32.partialorder %v103, 0.11111111
    %vm108 = vcmp.lt.f32.partialorder %v104, 0.11111111
    %vm109 = vcmp.lt.f32.partialorder %v105, 0.11111111
    %v110 = vmul.f32 %v102, 4.5
    %v111 = vmul.f32 %v103, 4.5
    %v112 = vmul.f32 %v104, 4.5
    %v113 = vmul.f32 %v105, 4.5
    %v114 = vmul.f32 %v110, %v102
    %v115 = vmul.f32 %v111, %v103
    %v116 = vmul.f32 %v112, %v104
    %v117 = vmul.f32 %v113, %v105
    %v118 = vsub.f32 %v102, 0.055555556
    %v119 = vsub.f32 %v103, 0.055555556
    %v120 = vsub.f32 %v104, 0.055555556
    %v121 = vsub.f32 %v105, 0.055555556
    %v122 = vsel %vm106, %v114, %v118
    %v123 = vsel %vm107, %v115, %v119
    %v124 = vsel %vm108, %v116, %v120
    %v125 = vsel %vm109, %v117, %v121
    %v126 = vmul.f32 %v122, %v94
    %v127 = vmul.f32 %v123, %v95
    %v128 = vmul.f32 %v124, %v96
    %v129 = vmul.f32 %v125, %v97
    %v130 = vld [vmem:[#allocation2] sm:$0xff]
    %v131 = vadd.f32 %v126, %v127
    %v132 = vadd.f32 %v131, %v128
    %v133 = vadd.f32 %v132, %v129
    %v134 = vadd.f32 %v130, %v133
    %135 = vst [vmem:[#allocation2] sm:$0xff] %v134
    // Predicated region
    $region18: #{_rpn_regr_loss_impl.1} parent=1 // pred_check
      %p136 = pneg %p76
    $region19: #{_rpn_regr_loss_impl.1} parent=1 // pred_check_branch
      %138 = sbr.rel (%p136) target = $region21
    $region20: #{_rpn_regr_loss_impl.1} parent=1 // pred_region
      %v139 = vld [vmem:[#allocation2] sm:$0xff]
      %140 = vadd.xlane.f32.xlu0 %v139
      %v141 = vpop.xlane.xlu0 %140
      %v142 = vrot.slane %v141, 4
      %v143 = vadd.f32 %v141, %v142
      %v144 = vrot.slane %v143, 2
      %v145 = vadd.f32 %v143, %v144
      %v146 = vrot.slane %v145, 1
      %v147 = vadd.f32 %v145, %v146
      %s148 = vtos %v147
      %s149 = scalar_lea.smem [#allocation3], 0
      %150 = sst [smem:[%s149]] %s148
    $region21: #{_rpn_regr_loss_impl.1} parent=1 // pred_fallthru
      _
    // Predicated region
    $region22: #{_rpn_regr_loss_impl.1} parent=1 // pred_check
      _
    $region23: #{_rpn_regr_loss_impl.1} parent=1 // pred_check_branch
      %152 = sbr.rel (0) target = $region25
    $region24: #{_rpn_regr_loss_impl.1} parent=1 // pred_region
      %154 = vsyncadd [#allocation4], 0
      %s156 = sshll.u32 %s3, 4
      %s157 = int_to_ptr.hbm [resolvable:$true] %s156
      %159 = dma.smem_to_hbm [#allocation3], 16, %s157, [#allocation4]
    $region25: #{_rpn_regr_loss_impl.1} parent=1 // pred_fallthru
      _
    // Predicated region
    $region26: #{_rpn_regr_loss_impl.1} parent=1 // pred_check
      _
    $region27: #{_rpn_regr_loss_impl.1} parent=1 // pred_check_branch
      %161 = sbr.rel (0) target = $region29
    $region28: #{_rpn_regr_loss_impl.1} parent=1 // pred_region
      %163 = dma.done [#allocation4], 16
    $region29: #{_rpn_regr_loss_impl.1} parent=1 // pred_fallthru
      _
    %164 = sfence
    %165 = vsyncpa [#allocation4], 1

</llo_original>
